<compile_context>
chip_gen: v6e
topology: v6e:2x2x1
jax: 0.10.0
libtpu: 0.0.40
codegen_flags: <defaults>
</compile_context>

<pallas_src>
import math

import jax
import jax.numpy as jnp
from jax.experimental import pallas as pl
from jax.experimental.pallas import tpu as pltpu

K = 5
M_UE = 8
ACT_DIM = K + M_UE + M_UE          # 21, as in the PyTorch file
STATE_DIM = 16                     # small synthetic state dim
HIDDEN = 128


def critic_kernel(state_ref, act_ref, w1s_ref, w1a_ref, b1_ref, w2_ref, b2_ref, o_ref):
    """Fused MLP tile with lane-dense output.

    state_ref: (TB, STATE_DIM)   VMEM (bf16 or f32)
    act_ref:   (TB, ACT_DIM)     VMEM (bf16 or f32)
    w1s_ref:   (STATE_DIM, 128)  VMEM (resident across grid)
    w1a_ref:   (ACT_DIM, 128)    VMEM (resident across grid)
    b1_ref:    (1, 128)          VMEM (f32)
    w2_ref:    (1, 128)          VMEM (f32, second-layer weight as a row)
    b2_ref:    (1, 1)            SMEM (f32 scalar)
    o_ref:     (1, TB)           VMEM (f32, batch on lanes)
    """
    # Layer 1: concat fused as two MXU matmuls, f32 accumulation, ReLU on the VPU.
    h = (jnp.dot(state_ref[...], w1s_ref[...], preferred_element_type=jnp.float32)
         + jnp.dot(act_ref[...], w1a_ref[...], preferred_element_type=jnp.float32)
         + b1_ref[...])
    h = jnp.maximum(h, 0.0)                                    # (TB, 128) f32

    # Layer 2: K=128 MXU matmul contracting the hidden dim of both operands:
    #   w2 (1,128) . h (TB,128) -> (1, TB)  -- batch lands on lanes (dense stores).
    o_row = jax.lax.dot_general(
        w2_ref[...], h,
        dimension_numbers=(((1,), (1,)), ((), ())),
        preferred_element_type=jnp.float32,
    ) + b2_ref[0, 0]
    o_ref[...] = o_row.astype(o_ref.dtype)


def _round_up(x, m):
    return ((x + m - 1) // m) * m


def _cdiv(a, b):
    return -(-a // b)


def _choose_tile(B, max_tb):
    """Pick (tile_rows, num_tiles): tile multiple of 128 (lane-dense output),
    few grid steps, bounded padding waste, >=2 steps for large B (v7x 2 TCs)."""
    max_tb = max(128, (max_tb // 128) * 128)
    num_tiles = max(1, _cdiv(B, max_tb))
    if B > 256 and num_tiles < 2:
        num_tiles = 2                      # give v7x's second TensorCore work
    tb = _round_up(_cdiv(B, num_tiles), 128)
    num_tiles = _cdiv(B, tb)               # rounding may have shrunk the count
    return tb, num_tiles


def critic_forward(state, act, params, *, max_tb=4096, use_bf16=True):
    """Fused Critic forward. state: (B, STATE_DIM), act: (B, ACT_DIM) -> (B, 1)."""
    w1s, w1a, b1, w2, b2 = params
    in_dtype = jnp.bfloat16 if use_bf16 else jnp.float32
    state = state.astype(in_dtype)
    act = act.astype(in_dtype)
    w1s = w1s.astype(in_dtype)
    w1a = w1a.astype(in_dtype)
    b1 = b1.astype(jnp.float32)
    w2 = w2.astype(jnp.float32)
    b2 = b2.astype(jnp.float32)

    B = state.shape[0]
    tb, num_tiles = _choose_tile(B, max_tb)
    b_pad = tb * num_tiles
    if b_pad != B:
        state = jnp.pad(state, ((0, b_pad - B), (0, 0)))
        act = jnp.pad(act, ((0, b_pad - B), (0, 0)))

    out_row = pl.pallas_call(
        critic_kernel,
        out_shape=jax.ShapeDtypeStruct((1, b_pad), jnp.float32),
        grid=(num_tiles,),
        in_specs=[
            pl.BlockSpec((tb, STATE_DIM), lambda i: (i, 0)),       # state tile
            pl.BlockSpec((tb, ACT_DIM), lambda i: (i, 0)),         # act tile
            pl.BlockSpec((STATE_DIM, HIDDEN), lambda i: (0, 0)),   # W1_s (resident)
            pl.BlockSpec((ACT_DIM, HIDDEN), lambda i: (0, 0)),     # W1_a (resident)
            pl.BlockSpec((1, HIDDEN), lambda i: (0, 0)),           # b1
            pl.BlockSpec((1, HIDDEN), lambda i: (0, 0)),           # w2 row
            pl.BlockSpec(memory_space=pltpu.MemorySpace.SMEM),     # b2 scalar
        ],
        out_specs=pl.BlockSpec((1, tb), lambda i: (0, i)),          # lane-dense row
        compiler_params=pltpu.CompilerParams(
            dimension_semantics=("parallel",),                      # megacore on v7x
        ),
    )(state, act, w1s, w1a, b1, w2, b2)

    # Lane-dense row back to the module's (B, 1) shape (reshape before the slice).
    return out_row[0, :B].reshape(B, 1)


def init_critic_params(key, state_dim, act_dim, hidden=HIDDEN):
    """PyTorch nn.Linear-style init (U(-1/sqrt(fan_in), 1/sqrt(fan_in))).

    W1 is stored pre-split & transposed: W1_s (state_dim, hidden), W1_a (act_dim, hidden).
    W2 is stored as a (1, hidden) row vector.
    """
    in_dim = state_dim + act_dim
    k1, k2, k3, k4, k5 = jax.random.split(key, 5)
    bound1 = 1.0 / math.sqrt(in_dim)
    bound2 = 1.0 / math.sqrt(hidden)
    w1s = jax.random.uniform(k1, (state_dim, hidden), jnp.float32, -bound1, bound1)
    w1a = jax.random.uniform(k2, (act_dim, hidden), jnp.float32, -bound1, bound1)
    b1 = jax.random.uniform(k3, (1, hidden), jnp.float32, -bound1, bound1)
    w2 = jax.random.uniform(k4, (1, hidden), jnp.float32, -bound2, bound2)
    b2 = jax.random.uniform(k5, (1, 1), jnp.float32, -bound2, bound2)
    return w1s, w1a, b1, w2, b2


def _reference(state, act, params):
    """Full-f32 reference matching the PyTorch semantics."""
    w1s, w1a, b1, w2, b2 = params
    with jax.default_matmul_precision("highest"):
        h = jnp.maximum(state @ w1s + act @ w1a + b1, 0.0)
        return h @ w2.T + b2


if __name__ == "__main__":
    root = jax.random.PRNGKey(0)
    kp, ks, ka = jax.random.split(root, 3)

    params = init_critic_params(kp, STATE_DIM, ACT_DIM)

    # 1) Small deployed-size batch (B=2), f32 path, single grid step, tight check.
    B = 2
    state = jax.random.normal(ks, (B, STATE_DIM), jnp.float32)
    act = jax.random.normal(ka, (B, ACT_DIM), jnp.float32)
    out = jax.block_until_ready(critic_forward(state, act, params, use_bf16=False))
    ref = _reference(state, act, params)
    assert out.shape == (B, 1)
    assert jnp.allclose(out, ref, atol=1e-3, rtol=1e-3), float(jnp.max(jnp.abs(out - ref)))

    # 2) Multi-tile grid + padding + lane-dense output path, bf16 inputs (default).
    #    B=300 with max_tb=128 -> tb=128, 3 grid steps, pad to 384 rows.
    B2 = 300
    ks2, ka2 = jax.random.split(jax.random.PRNGKey(1), 2)
    state2 = jax.random.normal(ks2, (B2, STATE_DIM), jnp.float32)
    act2 = jax.random.normal(ka2, (B2, ACT_DIM), jnp.float32)
    out2 = jax.block_until_ready(critic_forward(state2, act2, params, max_tb=128))
    ref2 = _reference(state2, act2, params)
    assert out2.shape == (B2, 1)
    # bf16 matmul operands -> looser tolerance vs. the f32 reference.
    assert jnp.allclose(out2, ref2, atol=3e-2, rtol=3e-2), float(jnp.max(jnp.abs(out2 - ref2)))

    print("KERNEL_OK")
</pallas_src>

<mosaic_0001>
module attributes {stable_mosaic.version = 11 : i64} {
  func.func @critic_kernel(%arg0: i32, %arg1: memref<128x16xf32, #tpu.memory_space<vmem>>, %arg2: memref<128x21xf32, #tpu.memory_space<vmem>>, %arg3: memref<16x128xf32, #tpu.memory_space<vmem>>, %arg4: memref<21x128xf32, #tpu.memory_space<vmem>>, %arg5: memref<1x128xf32, #tpu.memory_space<vmem>>, %arg6: memref<1x128xf32, #tpu.memory_space<vmem>>, %arg7: memref<1x1xf32, #tpu.memory_space<smem>>, %arg8: memref<1x128xf32, #tpu.memory_space<vmem>>) attributes {dimension_semantics = [#tpu.dimension_semantics<parallel>], iteration_bounds = array<i64: 1>, scalar_prefetch = 0 : i64, scratch_operands = 0 : i64, tpu.core_type = #tpu.core_type<tc>, window_params = [{transform_indices = @transform_0, window_bounds = array<i64: 128, 16>}, {transform_indices = @transform_1, window_bounds = array<i64: 128, 21>}, {pipeline_mode = #tpu.pipeline_mode<synchronous>, transform_indices = @transform_2, window_bounds = array<i64: 16, 128>}, {pipeline_mode = #tpu.pipeline_mode<synchronous>, transform_indices = @transform_3, window_bounds = array<i64: 21, 128>}, {pipeline_mode = #tpu.pipeline_mode<synchronous>, transform_indices = @transform_4, window_bounds = array<i64: 1, 128>}, {pipeline_mode = #tpu.pipeline_mode<synchronous>, transform_indices = @transform_5, window_bounds = array<i64: 1, 128>}, {transform_indices = @transform_6, window_bounds = array<i64: 1, 1>}, {transform_indices = @transform_7, window_bounds = array<i64: 1, 128>}]} {
    %c0 = arith.constant 0 : index
    %c0_0 = arith.constant 0 : index
    %0 = vector.load %arg1[%c0, %c0_0] : memref<128x16xf32, #tpu.memory_space<vmem>>, vector<128x16xf32>
    %c0_1 = arith.constant 0 : index
    %c0_2 = arith.constant 0 : index
    %1 = vector.load %arg3[%c0_1, %c0_2] : memref<16x128xf32, #tpu.memory_space<vmem>>, vector<16x128xf32>
    %cst = arith.constant dense<0.000000e+00> : vector<128x128xf32>
    %2 = tpu.matmul %0, %1, %cst {dimension_numbers = #tpu.dot_dimension_numbers<[1], [0], [0], [1], [0, 0, 1, 1], [], []>} : vector<128x16xf32>, vector<16x128xf32>, vector<128x128xf32> -> vector<128x128xf32>
    %c0_3 = arith.constant 0 : index
    %c0_4 = arith.constant 0 : index
    %3 = vector.load %arg2[%c0_3, %c0_4] : memref<128x21xf32, #tpu.memory_space<vmem>>, vector<128x21xf32>
    %c0_5 = arith.constant 0 : index
    %c0_6 = arith.constant 0 : index
    %4 = vector.load %arg4[%c0_5, %c0_6] : memref<21x128xf32, #tpu.memory_space<vmem>>, vector<21x128xf32>
    %cst_7 = arith.constant dense<0.000000e+00> : vector<128x128xf32>
    %5 = tpu.matmul %3, %4, %cst_7 {dimension_numbers = #tpu.dot_dimension_numbers<[1], [0], [0], [1], [0, 0, 1, 1], [], []>} : vector<128x21xf32>, vector<21x128xf32>, vector<128x128xf32> -> vector<128x128xf32>
    %6 = arith.addf %2, %5 : vector<128x128xf32>
    %c0_8 = arith.constant 0 : index
    %c0_9 = arith.constant 0 : index
    %7 = vector.load %arg5[%c0_8, %c0_9] : memref<1x128xf32, #tpu.memory_space<vmem>>, vector<1x128xf32>
    %8 = vector.broadcast %7 : vector<1x128xf32> to vector<128x128xf32>
    %9 = arith.addf %6, %8 : vector<128x128xf32>
    %cst_10 = arith.constant 0.000000e+00 : f32
    %10 = vector.broadcast %cst_10 : f32 to vector<128x128xf32>
    %11 = arith.maximumf %9, %10 : vector<128x128xf32>
    %c0_11 = arith.constant 0 : index
    %c0_12 = arith.constant 0 : index
    %12 = vector.load %arg6[%c0_11, %c0_12] : memref<1x128xf32, #tpu.memory_space<vmem>>, vector<1x128xf32>
    %cst_13 = arith.constant dense<0.000000e+00> : vector<1x128xf32>
    %13 = tpu.matmul %12, %11, %cst_13 {dimension_numbers = #tpu.dot_dimension_numbers<[1], [1], [0], [0], [0, 0, 1, 0], [], []>} : vector<1x128xf32>, vector<128x128xf32>, vector<1x128xf32> -> vector<1x128xf32>
    %c0_14 = arith.constant 0 : index
    %c0_15 = arith.constant 0 : index
    %14 = memref.load %arg7[%c0_14, %c0_15] : memref<1x1xf32, #tpu.memory_space<smem>>
    %15 = vector.broadcast %14 : f32 to vector<1x128xf32>
    %16 = arith.addf %13, %15 : vector<1x128xf32>
    %c0_16 = arith.constant 0 : index
    %c0_17 = arith.constant 0 : index
    %17 = vector.load %arg8[%c0_16, %c0_17] : memref<1x128xf32, #tpu.memory_space<vmem>>, vector<1x128xf32>
    tpu.vector_store %arg8[%c0_16, %c0_17], %16 {strides = array<i32>} : memref<1x128xf32, #tpu.memory_space<vmem>>, vector<1x128xf32>,
    return
  }
  func.func @transform_0(%arg0: i32) -> (i32, i32) {
    %c0_i32 = arith.constant 0 : i32
    %c0_i32_0 = arith.constant 0 : i32
    return %arg0, %c0_i32 : i32, i32
  }
  func.func @transform_1(%arg0: i32) -> (i32, i32) {
    %c0_i32 = arith.constant 0 : i32
    %c0_i32_0 = arith.constant 0 : i32
    return %arg0, %c0_i32 : i32, i32
  }
  func.func @transform_2(%arg0: i32) -> (i32, i32) {
    %c0_i32 = arith.constant 0 : i32
    %c0_i32_0 = arith.constant 0 : i32
    %c0_i32_1 = arith.constant 0 : i32
    return %c0_i32, %c0_i32_0 : i32, i32
  }
  func.func @transform_3(%arg0: i32) -> (i32, i32) {
    %c0_i32 = arith.constant 0 : i32
    %c0_i32_0 = arith.constant 0 : i32
    %c0_i32_1 = arith.constant 0 : i32
    return %c0_i32, %c0_i32_0 : i32, i32
  }
  func.func @transform_4(%arg0: i32) -> (i32, i32) {
    %c0_i32 = arith.constant 0 : i32
    %c0_i32_0 = arith.constant 0 : i32
    %c0_i32_1 = arith.constant 0 : i32
    return %c0_i32, %c0_i32_0 : i32, i32
  }
  func.func @transform_5(%arg0: i32) -> (i32, i32) {
    %c0_i32 = arith.constant 0 : i32
    %c0_i32_0 = arith.constant 0 : i32
    %c0_i32_1 = arith.constant 0 : i32
    return %c0_i32, %c0_i32_0 : i32, i32
  }
  func.func @transform_6(%arg0: i32) -> (i32, i32) {
    %c0_i32 = arith.constant 0 : i32
    %c0_i32_0 = arith.constant 0 : i32
    %c0_i32_1 = arith.constant 0 : i32
    return %c0_i32, %c0_i32_0 : i32, i32
  }
  func.func @transform_7(%arg0: i32) -> (i32, i32) {
    %c0_i32 = arith.constant 0 : i32
    %c0_i32_0 = arith.constant 0 : i32
    return %c0_i32, %arg0 : i32, i32
  }
}

</mosaic_0001>

<llo_original>
// kernel: tpu_custom_call.1
$region0: #{tpu_custom_call.1}
  #allocation0 [shape = 'u32[]', space=smem, size = 0x4, offset = 0x4, fixed_abs, tag = 'smem constant byte address 0x4 - core index']
  #allocation1 [shape = 'u32[144,128]{1,0:T(1,128)}', space=vmem, size = 0x12000, scoped, tag = 'internal scratch']
  #allocation2 [shape = 'f32[1,1]{1,0:T(1,128)S(6)}', space=smem, size = 0x200, scoped, tag = 'scoped memory for tpu_custom_call.1']
  %s0 = inlined_call_operand.vmem [shape: f32[128,16], index: 0, kind: input, shape index: {}]
  %s1 = inlined_call_operand.vmem [shape: f32[128,21], index: 1, kind: input, shape index: {}]
  %s2 = inlined_call_operand.vmem [shape: f32[16,128], index: 2, kind: input, shape index: {}]
  %s3 = inlined_call_operand.vmem [shape: f32[21,128], index: 3, kind: input, shape index: {}]
  %s4 = inlined_call_operand.vmem [shape: f32[1,128], index: 4, kind: input, shape index: {}]
  %s5 = inlined_call_operand.vmem [shape: f32[1,128], index: 5, kind: input, shape index: {}]
  %s6 = inlined_call_operand.<no memory space> [shape: f32[1,1], index: 6, kind: input, shape index: {}]
  %s7 = inlined_call_operand.hbm [shape: f32[1,128], index: 7, kind: output, shape index: {}]
  %s8 = sld [smem:[#allocation0]]
  $region38: #{tpu_custom_call.1} parent=0
    _
  %s10 = ssub.s32 1, %s8
  %s11 = scalar_select 0, %s10, %s8
  %12 = sst [smem:[#allocation2]] %s6
  $region1: #{tpu_custom_call.1} parent=0
    #allocation3 [shape = 'u8[512]{0}', space=vmem, size = 0x400, scoped, tag = 'output window, operand 0, single buffered']
    #allocation4 [shape = 's32[1]{0}', space=sflag, size = 0x4, scoped, tag = 'scoped memory for tpu_custom_call.1']
    %13 = vsyncpa [#allocation4], 0
    // Predicated region
    $region2: #{tpu_custom_call.1} parent=1 // pred_check
      _
    $region3: #{tpu_custom_call.1} parent=1 // pred_check_branch
      %15 = sbr.rel (0) target = $region5
    $region4: #{tpu_custom_call.1} parent=1 // pred_region
      _
    $region5: #{tpu_custom_call.1} parent=1 // pred_fallthru
      _
    // Predicated region
    $region6: #{tpu_custom_call.1} parent=1 // pred_check
      _
    $region7: #{tpu_custom_call.1} parent=1 // pred_check_branch
      %17 = sbr.rel (0) target = $region9
    $region8: #{tpu_custom_call.1} parent=1 // pred_region
      _
    $region9: #{tpu_custom_call.1} parent=1 // pred_fallthru
      _
    // Predicated region
    $region10: #{tpu_custom_call.1} parent=1 // pred_check
      _
    $region11: #{tpu_custom_call.1} parent=1 // pred_check_branch
      %19 = sbr.rel (0) target = $region13
    $region12: #{tpu_custom_call.1} parent=1 // pred_region
      _
    $region13: #{tpu_custom_call.1} parent=1 // pred_fallthru
      _
    // Predicated region
    $region14: #{tpu_custom_call.1} parent=1 // pred_check
      _
    $region15: #{tpu_custom_call.1} parent=1 // pred_check_branch
      %21 = sbr.rel (0) target = $region17
    $region16: #{tpu_custom_call.1} parent=1 // pred_region
      _
    $region17: #{tpu_custom_call.1} parent=1 // pred_fallthru
      _
    // Predicated region
    $region18: #{tpu_custom_call.1} parent=1 // pred_check
      _
    $region19: #{tpu_custom_call.1} parent=1 // pred_check_branch
      %23 = sbr.rel (0) target = $region21
    $region20: #{tpu_custom_call.1} parent=1 // pred_region
      _
    $region21: #{tpu_custom_call.1} parent=1 // pred_fallthru
      _
    // Predicated region
    $region22: #{tpu_custom_call.1} parent=1 // pred_check
      _
    $region23: #{tpu_custom_call.1} parent=1 // pred_check_branch
      %25 = sbr.rel (0) target = $region25
    $region24: #{tpu_custom_call.1} parent=1 // pred_region
      _
    $region25: #{tpu_custom_call.1} parent=1 // pred_fallthru
      _
    // Predicated region
    $region26: #{tpu_custom_call.1} parent=1 // pred_check
      _
    $region27: #{tpu_custom_call.1} parent=1 // pred_check_branch
      %27 = sbr.rel (0) target = $region29
    $region28: #{tpu_custom_call.1} parent=1 // pred_region
      _
    $region29: #{tpu_custom_call.1} parent=1 // pred_fallthru
      _
    %v28 = vld [vmem:[%s0] sm:$0xff]
    %v29 = vld [vmem:[%s0 + $0x8] sm:$0xff]
    %v30 = vld [vmem:[%s0 + $0x10] sm:$0xff]
    %v31 = vld [vmem:[%s0 + $0x18] sm:$0xff]
    %v32 = vld [vmem:[%s0 + $0x20] sm:$0xff]
    %v33 = vld [vmem:[%s0 + $0x28] sm:$0xff]
    %v34 = vld [vmem:[%s0 + $0x30] sm:$0xff]
    %v35 = vld [vmem:[%s0 + $0x38] sm:$0xff]
    %v36 = vld [vmem:[%s0 + $0x40] sm:$0xff]
    %v37 = vld [vmem:[%s0 + $0x48] sm:$0xff]
    %v38 = vld [vmem:[%s0 + $0x50] sm:$0xff]
    %v39 = vld [vmem:[%s0 + $0x58] sm:$0xff]
    %v40 = vld [vmem:[%s0 + $0x60] sm:$0xff]
    %v41 = vld [vmem:[%s0 + $0x68] sm:$0xff]
    %v42 = vld [vmem:[%s0 + $0x70] sm:$0xff]
    %v43 = vld [vmem:[%s0 + $0x78] sm:$0xff]
    %v44 = vld [vmem:[%s2] sm:$0xff]
    %v45 = vld [vmem:[%s2 + $0x8] sm:$0xff]
    %v46 = vld [vmem:[%s1] sm:$0xff]
    %v47 = vld [vmem:[%s1 + $0x8] sm:$0xff]
    %v48 = vld [vmem:[%s1 + $0x10] sm:$0xff]
    %v49 = vld [vmem:[%s1 + $0x18] sm:$0xff]
    %v50 = vld [vmem:[%s1 + $0x20] sm:$0xff]
    %v51 = vld [vmem:[%s1 + $0x28] sm:$0xff]
    %v52 = vld [vmem:[%s1 + $0x30] sm:$0xff]
    %v53 = vld [vmem:[%s1 + $0x38] sm:$0xff]
    %v54 = vld [vmem:[%s1 + $0x40] sm:$0xff]
    %v55 = vld [vmem:[%s1 + $0x48] sm:$0xff]
    %v56 = vld [vmem:[%s1 + $0x50] sm:$0xff]
    %v57 = vld [vmem:[%s1 + $0x58] sm:$0xff]
    %v58 = vld [vmem:[%s1 + $0x60] sm:$0xff]
    %v59 = vld [vmem:[%s1 + $0x68] sm:$0xff]
    %v60 = vld [vmem:[%s1 + $0x70] sm:$0xff]
    %v61 = vld [vmem:[%s1 + $0x78] sm:$0xff]
    %v62 = vld [vmem:[%s3] sm:$0xff]
    %v63 = vld [vmem:[%s3 + $0x8] sm:$0xff]
    %v64 = vld [vmem:[%s3 + $0x10] sm:$0x1f]
    %vm65 = vcmask 171008
    %v67 = vsel %vm65, %v46, 0
    %v70 = vsel %vm65, %v47, 0
    %v73 = vsel %vm65, %v48, 0
    %v76 = vsel %vm65, %v49, 0
    %v79 = vsel %vm65, %v50, 0
    %v82 = vsel %vm65, %v51, 0
    %v85 = vsel %vm65, %v52, 0
    %v88 = vsel %vm65, %v53, 0
    %v91 = vsel %vm65, %v54, 0
    %v94 = vsel %vm65, %v55, 0
    %v97 = vsel %vm65, %v56, 0
    %v100 = vsel %vm65, %v57, 0
    %v103 = vsel %vm65, %v58, 0
    %v106 = vsel %vm65, %v59, 0
    %v109 = vsel %vm65, %v60, 0
    %v112 = vsel %vm65, %v61, 0
    %vm114 = vcmask 1044480
    %v116 = vsel %vm114, %v64, 0
    %118 = vmatprep.subr.mxu0 0.0
    %119 = vmatpush1.msra.mxu0 0.0
    %120 = vmatprep.subr.mxu0 0.0
    %121 = vmatpush1.msra.mxu0 0.0
    %122 = vmatprep.subr.mxu0 0.0
    %123 = vmatpush1.msra.mxu0 0.0
    %124 = vmatprep.subr.mxu0 0.0
    %125 = vmatpush1.msra.mxu0 0.0
    %126 = vmatprep.subr.mxu0 0.0
    %127 = vmatpush1.msra.mxu0 0.0
    %128 = vmatprep.subr.mxu0 0.0
    %129 = vmatpush1.msra.mxu0 0.0
    %130 = vmatprep.subr.mxu0 0.0
    %131 = vmatpush1.msra.mxu0 0.0
    %132 = vmatprep.subr.mxu0 0.0
    %133 = vmatpush1.msra.mxu0 0.0
    %134 = vmatprep.subr.mxu0 0.0
    %135 = vmatpush1.msra.mxu0 0.0
    %136 = vmatprep.subr.mxu0 0.0
    %137 = vmatpush1.msra.mxu0 0.0
    %138 = vmatprep.subr.mxu0 0.0
    %139 = vmatpush1.msra.mxu0 0.0
    %140 = vmatprep.subr.mxu0 0.0
    %141 = vmatpush1.msra.mxu0 0.0
    %142 = vmatprep.subr.mxu0 0.0
    %143 = vmatpush1.msra.mxu0 0.0
    %144 = vmatprep.subr.mxu0 0.0
    %145 = vmatpush1.msra.mxu0 %v116
    %146 = vmatprep.subr.mxu0 0.0
    %147 = vmatpush1.msra.mxu0 %v63
    %148 = vmatprep.subr.mxu0 0.0
    %149 = vmatpush1.msra.mxu0 %v62
    %150 = vmatprep.subr.mxu0 0.0
    %151 = vmatpush2.msra.mxu0 0.0
    %152 = vmatprep.subr.mxu0 0.0
    %153 = vmatpush2.msra.mxu0 0.0
    %154 = vmatprep.subr.mxu0 0.0
    %155 = vmatpush2.msra.mxu0 0.0
    %156 = vmatprep.subr.mxu0 0.0
    %157 = vmatpush2.msra.mxu0 0.0
    %158 = vmatprep.subr.mxu0 0.0
    %159 = vmatpush2.msra.mxu0 0.0
    %160 = vmatprep.subr.mxu0 0.0
    %161 = vmatpush2.msra.mxu0 0.0
    %162 = vmatprep.subr.mxu0 0.0
    %163 = vmatpush2.msra.mxu0 0.0
    %164 = vmatprep.subr.mxu0 0.0
    %165 = vmatpush2.msra.mxu0 0.0
    %166 = vmatprep.subr.mxu0 0.0
    %167 = vmatpush2.msra.mxu0 0.0
    %168 = vmatprep.subr.mxu0 0.0
    %169 = vmatpush2.msra.mxu0 0.0
    %170 = vmatprep.subr.mxu0 0.0
    %171 = vmatpush2.msra.mxu0 0.0
    %172 = vmatprep.subr.mxu0 0.0
    %173 = vmatpush2.msra.mxu0 0.0
    %174 = vmatprep.subr.mxu0 0.0
    %175 = vmatpush2.msra.mxu0 0.0
    %176 = vmatprep.subr.mxu0 0.0
    %177 = vmatpush2.msra.mxu0 0.0
    %178 = vmatprep.subr.mxu0 0.0
    %179 = vmatpush2.msra.mxu0 0.0
    %180 = vmatprep.subr.mxu0 0.0
    %181 = vmatpush2.msra.mxu0 0.0
    %182 = vmatprep.mubr.f32.mxu0 0.0
    %183 = vmatmul.mubr.f32.gmra.mxu0 %v67
    %v184 = vpop.f32.mrf.mxu0
    %v185 = vadd.f32 0.0, %v184
    %v186 = vpop.f32.mrf.mxu0
    %187 = vmatprep.mubr.f32.mxu0 0.0
    %188 = vmatmul.mubr.f32.gmra.mxu0 %v70
    %v189 = vpop.f32.mrf.mxu0
    %v190 = vadd.f32 0.0, %v189
    %v191 = vpop.f32.mrf.mxu0
    %192 = vmatprep.mubr.f32.mxu0 0.0
    %193 = vmatmul.mubr.f32.gmra.mxu0 %v73
    %v194 = vpop.f32.mrf.mxu0
    %v195 = vadd.f32 0.0, %v194
    %v196 = vpop.f32.mrf.mxu0
    %197 = vmatprep.mubr.f32.mxu0 0.0
    %198 = vmatmul.mubr.f32.gmra.mxu0 %v76
    %v199 = vpop.f32.mrf.mxu0
    %v200 = vadd.f32 0.0, %v199
    %v201 = vpop.f32.mrf.mxu0
    %202 = vmatprep.mubr.f32.mxu0 0.0
    %203 = vmatmul.mubr.f32.gmra.mxu0 %v79
    %v204 = vpop.f32.mrf.mxu0
    %v205 = vadd.f32 0.0, %v204
    %v206 = vpop.f32.mrf.mxu0
    %207 = vmatprep.mubr.f32.mxu0 0.0
    %208 = vmatmul.mubr.f32.gmra.mxu0 %v82
    %v209 = vpop.f32.mrf.mxu0
    %v210 = vadd.f32 0.0, %v209
    %v211 = vpop.f32.mrf.mxu0
    %212 = vmatprep.mubr.f32.mxu0 0.0
    %213 = vmatmul.mubr.f32.gmra.mxu0 %v85
    %v214 = vpop.f32.mrf.mxu0
    %v215 = vadd.f32 0.0, %v214
    %v216 = vpop.f32.mrf.mxu0
    %217 = vmatprep.mubr.f32.mxu0 0.0
    %218 = vmatmul.mubr.f32.gmra.mxu0 %v88
    %v219 = vpop.f32.mrf.mxu0
    %v220 = vadd.f32 0.0, %v219
    %v221 = vpop.f32.mrf.mxu0
    %222 = vmatprep.mubr.f32.mxu0 0.0
    %223 = vmatmul.mubr.f32.gmra.mxu0 %v91
    %v224 = vpop.f32.mrf.mxu0
    %v225 = vadd.f32 0.0, %v224
    %v226 = vpop.f32.mrf.mxu0
    %227 = vmatprep.mubr.f32.mxu0 0.0
    %228 = vmatmul.mubr.f32.gmra.mxu0 %v94
    %v229 = vpop.f32.mrf.mxu0
    %v230 = vadd.f32 0.0, %v229
    %v231 = vpop.f32.mrf.mxu0
    %232 = vmatprep.mubr.f32.mxu0 0.0
    %233 = vmatmul.mubr.f32.gmra.mxu0 %v97
    %v234 = vpop.f32.mrf.mxu0
    %v235 = vadd.f32 0.0, %v234
    %v236 = vpop.f32.mrf.mxu0
    %237 = vmatprep.mubr.f32.mxu0 0.0
    %238 = vmatmul.mubr.f32.gmra.mxu0 %v100
    %v239 = vpop.f32.mrf.mxu0
    %v240 = vadd.f32 0.0, %v239
    %v241 = vpop.f32.mrf.mxu0
    %242 = vmatprep.mubr.f32.mxu0 0.0
    %243 = vmatmul.mubr.f32.gmra.mxu0 %v103
    %v244 = vpop.f32.mrf.mxu0
    %v245 = vadd.f32 0.0, %v244
    %v246 = vpop.f32.mrf.mxu0
    %247 = vmatprep.mubr.f32.mxu0 0.0
    %248 = vmatmul.mubr.f32.gmra.mxu0 %v106
    %v249 = vpop.f32.mrf.mxu0
    %v250 = vadd.f32 0.0, %v249
    %v251 = vpop.f32.mrf.mxu0
    %252 = vmatprep.mubr.f32.mxu0 0.0
    %253 = vmatmul.mubr.f32.gmra.mxu0 %v109
    %v254 = vpop.f32.mrf.mxu0
    %v255 = vadd.f32 0.0, %v254
    %v256 = vpop.f32.mrf.mxu0
    %257 = vmatprep.mubr.f32.mxu0 0.0
    %258 = vmatmul.mubr.f32.gmra.mxu0 %v112
    %v259 = vpop.f32.mrf.mxu0
    %v260 = vadd.f32 0.0, %v259
    %v261 = vpop.f32.mrf.mxu0
    %262 = vdwg.mxu0
    %vm263 = vcmask 130048
    %v265 = vsel %vm263, %v28, 0
    %v268 = vsel %vm263, %v29, 0
    %v271 = vsel %vm263, %v30, 0
    %v274 = vsel %vm263, %v31, 0
    %v277 = vsel %vm263, %v32, 0
    %v280 = vsel %vm263, %v33, 0
    %v283 = vsel %vm263, %v34, 0
    %v286 = vsel %vm263, %v35, 0
    %v289 = vsel %vm263, %v36, 0
    %v292 = vsel %vm263, %v37, 0
    %v295 = vsel %vm263, %v38, 0
    %v298 = vsel %vm263, %v39, 0
    %v301 = vsel %vm263, %v40, 0
    %v304 = vsel %vm263, %v41, 0
    %v307 = vsel %vm263, %v42, 0
    %v310 = vsel %vm263, %v43, 0
    %312 = vmatprep.subr.mxu0 0.0
    %313 = vmatpush1.msra.mxu0 0.0
    %314 = vmatprep.subr.mxu0 0.0
    %315 = vmatpush1.msra.mxu0 0.0
    %316 = vmatprep.subr.mxu0 0.0
    %317 = vmatpush1.msra.mxu0 0.0
    %318 = vmatprep.subr.mxu0 0.0
    %319 = vmatpush1.msra.mxu0 0.0
    %320 = vmatprep.subr.mxu0 0.0
    %321 = vmatpush1.msra.mxu0 0.0
    %322 = vmatprep.subr.mxu0 0.0
    %323 = vmatpush1.msra.mxu0 0.0
    %324 = vmatprep.subr.mxu0 0.0
    %325 = vmatpush1.msra.mxu0 0.0
    %326 = vmatprep.subr.mxu0 0.0
    %327 = vmatpush1.msra.mxu0 0.0
    %328 = vmatprep.subr.mxu0 0.0
    %329 = vmatpush1.msra.mxu0 0.0
    %330 = vmatprep.subr.mxu0 0.0
    %331 = vmatpush1.msra.mxu0 0.0
    %332 = vmatprep.subr.mxu0 0.0
    %333 = vmatpush1.msra.mxu0 0.0
    %334 = vmatprep.subr.mxu0 0.0
    %335 = vmatpush1.msra.mxu0 0.0
    %336 = vmatprep.subr.mxu0 0.0
    %337 = vmatpush1.msra.mxu0 0.0
    %338 = vmatprep.subr.mxu0 0.0
    %339 = vmatpush1.msra.mxu0 0.0
    %340 = vmatprep.subr.mxu0 0.0
    %341 = vmatpush1.msra.mxu0 %v45
    %342 = vmatprep.subr.mxu0 0.0
    %343 = vmatpush1.msra.mxu0 %v44
    %344 = vmatprep.subr.mxu0 0.0
    %345 = vmatpush2.msra.mxu0 0.0
    %346 = vmatprep.subr.mxu0 0.0
    %347 = vmatpush2.msra.mxu0 0.0
    %348 = vmatprep.subr.mxu0 0.0
    %349 = vmatpush2.msra.mxu0 0.0
    %350 = vmatprep.subr.mxu0 0.0
    %351 = vmatpush2.msra.mxu0 0.0
    %352 = vmatprep.subr.mxu0 0.0
    %353 = vmatpush2.msra.mxu0 0.0
    %354 = vmatprep.subr.mxu0 0.0
    %355 = vmatpush2.msra.mxu0 0.0
    %356 = vmatprep.subr.mxu0 0.0
    %357 = vmatpush2.msra.mxu0 0.0
    %358 = vmatprep.subr.mxu0 0.0
    %359 = vmatpush2.msra.mxu0 0.0
    %360 = vmatprep.subr.mxu0 0.0
    %361 = vmatpush2.msra.mxu0 0.0
    %362 = vmatprep.subr.mxu0 0.0
    %363 = vmatpush2.msra.mxu0 0.0
    %364 = vmatprep.subr.mxu0 0.0
    %365 = vmatpush2.msra.mxu0 0.0
    %366 = vmatprep.subr.mxu0 0.0
    %367 = vmatpush2.msra.mxu0 0.0
    %368 = vmatprep.subr.mxu0 0.0
    %369 = vmatpush2.msra.mxu0 0.0
    %370 = vmatprep.subr.mxu0 0.0
    %371 = vmatpush2.msra.mxu0 0.0
    %372 = vmatprep.subr.mxu0 0.0
    %373 = vmatpush2.msra.mxu0 0.0
    %374 = vmatprep.subr.mxu0 0.0
    %375 = vmatpush2.msra.mxu0 0.0
    %376 = vmatprep.mubr.f32.mxu0 0.0
    %377 = vmatmul.mubr.f32.gmra.mxu0 %v265
    %v378 = vpop.f32.mrf.mxu0
    %v379 = vadd.f32 %v185, %v378
    %v380 = vpop.f32.mrf.mxu0
    %381 = vmatprep.mubr.f32.mxu0 0.0
    %382 = vmatmul.mubr.f32.gmra.mxu0 %v268
    %v383 = vpop.f32.mrf.mxu0
    %v384 = vadd.f32 %v190, %v383
    %v385 = vpop.f32.mrf.mxu0
    %386 = vmatprep.mubr.f32.mxu0 0.0
    %387 = vmatmul.mubr.f32.gmra.mxu0 %v271
    %v388 = vpop.f32.mrf.mxu0
    %v389 = vadd.f32 %v195, %v388
    %v390 = vpop.f32.mrf.mxu0
    %391 = vmatprep.mubr.f32.mxu0 0.0
    %392 = vmatmul.mubr.f32.gmra.mxu0 %v274
    %v393 = vpop.f32.mrf.mxu0
    %v394 = vadd.f32 %v200, %v393
    %v395 = vpop.f32.mrf.mxu0
    %396 = vmatprep.mubr.f32.mxu0 0.0
    %397 = vmatmul.mubr.f32.gmra.mxu0 %v277
    %v398 = vpop.f32.mrf.mxu0
    %v399 = vadd.f32 %v205, %v398
    %v400 = vpop.f32.mrf.mxu0
    %401 = vmatprep.mubr.f32.mxu0 0.0
    %402 = vmatmul.mubr.f32.gmra.mxu0 %v280
    %v403 = vpop.f32.mrf.mxu0
    %v404 = vadd.f32 %v210, %v403
    %v405 = vpop.f32.mrf.mxu0
    %406 = vmatprep.mubr.f32.mxu0 0.0
    %407 = vmatmul.mubr.f32.gmra.mxu0 %v283
    %v408 = vpop.f32.mrf.mxu0
    %v409 = vadd.f32 %v215, %v408
    %v410 = vpop.f32.mrf.mxu0
    %411 = vmatprep.mubr.f32.mxu0 0.0
    %412 = vmatmul.mubr.f32.gmra.mxu0 %v286
    %v413 = vpop.f32.mrf.mxu0
    %v414 = vadd.f32 %v220, %v413
    %v415 = vpop.f32.mrf.mxu0
    %416 = vmatprep.mubr.f32.mxu0 0.0
    %417 = vmatmul.mubr.f32.gmra.mxu0 %v289
    %v418 = vpop.f32.mrf.mxu0
    %v419 = vadd.f32 %v225, %v418
    %v420 = vpop.f32.mrf.mxu0
    %421 = vmatprep.mubr.f32.mxu0 0.0
    %422 = vmatmul.mubr.f32.gmra.mxu0 %v292
    %v423 = vpop.f32.mrf.mxu0
    %v424 = vadd.f32 %v230, %v423
    %v425 = vpop.f32.mrf.mxu0
    %426 = vmatprep.mubr.f32.mxu0 0.0
    %427 = vmatmul.mubr.f32.gmra.mxu0 %v295
    %v428 = vpop.f32.mrf.mxu0
    %v429 = vadd.f32 %v235, %v428
    %v430 = vpop.f32.mrf.mxu0
    %431 = vmatprep.mubr.f32.mxu0 0.0
    %432 = vmatmul.mubr.f32.gmra.mxu0 %v298
    %v433 = vpop.f32.mrf.mxu0
    %v434 = vadd.f32 %v240, %v433
    %v435 = vpop.f32.mrf.mxu0
    %436 = vmatprep.mubr.f32.mxu0 0.0
    %437 = vmatmul.mubr.f32.gmra.mxu0 %v301
    %v438 = vpop.f32.mrf.mxu0
    %v439 = vadd.f32 %v245, %v438
    %v440 = vpop.f32.mrf.mxu0
    %441 = vmatprep.mubr.f32.mxu0 0.0
    %442 = vmatmul.mubr.f32.gmra.mxu0 %v304
    %v443 = vpop.f32.mrf.mxu0
    %v444 = vadd.f32 %v250, %v443
    %v445 = vpop.f32.mrf.mxu0
    %446 = vmatprep.mubr.f32.mxu0 0.0
    %447 = vmatmul.mubr.f32.gmra.mxu0 %v307
    %v448 = vpop.f32.mrf.mxu0
    %v449 = vadd.f32 %v255, %v448
    %v450 = vpop.f32.mrf.mxu0
    %451 = vmatprep.mubr.f32.mxu0 0.0
    %452 = vmatmul.mubr.f32.gmra.mxu0 %v310
    %v453 = vpop.f32.mrf.mxu0
    %v454 = vadd.f32 %v260, %v453
    %v455 = vpop.f32.mrf.mxu0
    %456 = vdwg.mxu0
    %v457 = vld [vmem:[%s4] sm:$0x1]
    %v459 = vlaneseq
    %v460 = vshrl.u32 %v459, 7
    %v461 = vsub.s32 0, %v460
    %v462 = vrot.slane %v457, %v461
    %v464 = vadd.f32 %v379, %v462
    %v465 = vadd.f32 %v384, %v462
    %v466 = vadd.f32 %v389, %v462
    %v467 = vadd.f32 %v394, %v462
    %v468 = vadd.f32 %v399, %v462
    %v469 = vadd.f32 %v404, %v462
    %v470 = vadd.f32 %v409, %v462
    %v471 = vadd.f32 %v414, %v462
    %v472 = vadd.f32 %v419, %v462
    %v473 = vadd.f32 %v424, %v462
    %v474 = vadd.f32 %v429, %v462
    %v475 = vadd.f32 %v434, %v462
    %v476 = vadd.f32 %v439, %v462
    %v477 = vadd.f32 %v444, %v462
    %v478 = vadd.f32 %v449, %v462
    %v479 = vadd.f32 %v454, %v462
    %v480 = vmax.f32 %v464, 0.0
    %v481 = vmax.f32 %v465, 0.0
    %v482 = vmax.f32 %v466, 0.0
    %v483 = vmax.f32 %v467, 0.0
    %v484 = vmax.f32 %v468, 0.0
    %v485 = vmax.f32 %v469, 0.0
    %v486 = vmax.f32 %v470, 0.0
    %v487 = vmax.f32 %v471, 0.0
    %v488 = vmax.f32 %v472, 0.0
    %v489 = vmax.f32 %v473, 0.0
    %v490 = vmax.f32 %v474, 0.0
    %v491 = vmax.f32 %v475, 0.0
    %v492 = vmax.f32 %v476, 0.0
    %v493 = vmax.f32 %v477, 0.0
    %v494 = vmax.f32 %v478, 0.0
    %v495 = vmax.f32 %v479, 0.0
    %v496 = vld [vmem:[%s5] sm:$0x1]
    %s497 = sld [smem:[#allocation2]]
    %v498 = vstv %s497
    %499 = vmatprep.subr.mxu0 0.0
    %500 = vmatpush1.xpose.msra.mxu0 %v495
    %501 = vmatprep.subr.mxu0 0.0
    %502 = vmatpush1.xpose.msra.mxu0 %v494
    %503 = vmatprep.subr.mxu0 0.0
    %504 = vmatpush1.xpose.msra.mxu0 %v493
    %505 = vmatprep.subr.mxu0 0.0
    %506 = vmatpush1.xpose.msra.mxu0 %v492
    %507 = vmatprep.subr.mxu0 0.0
    %508 = vmatpush1.xpose.msra.mxu0 %v491
    %509 = vmatprep.subr.mxu0 0.0
    %510 = vmatpush1.xpose.msra.mxu0 %v490
    %511 = vmatprep.subr.mxu0 0.0
    %512 = vmatpush1.xpose.msra.mxu0 %v489
    %513 = vmatprep.subr.mxu0 0.0
    %514 = vmatpush1.xpose.msra.mxu0 %v488
    %515 = vmatprep.subr.mxu0 0.0
    %516 = vmatpush1.xpose.msra.mxu0 %v487
    %517 = vmatprep.subr.mxu0 0.0
    %518 = vmatpush1.xpose.msra.mxu0 %v486
    %519 = vmatprep.subr.mxu0 0.0
    %520 = vmatpush1.xpose.msra.mxu0 %v485
    %521 = vmatprep.subr.mxu0 0.0
    %522 = vmatpush1.xpose.msra.mxu0 %v484
    %523 = vmatprep.subr.mxu0 0.0
    %524 = vmatpush1.xpose.msra.mxu0 %v483
    %525 = vmatprep.subr.mxu0 0.0
    %526 = vmatpush1.xpose.msra.mxu0 %v482
    %527 = vmatprep.subr.mxu0 0.0
    %528 = vmatpush1.xpose.msra.mxu0 %v481
    %529 = vmatprep.subr.mxu0 0.0
    %530 = vmatpush1.xpose.msra.mxu0 %v480
    %531 = vmatprep.subr.mxu0 0.0
    %532 = vmatpush2.xpose.msra.mxu0 0.0
    %533 = vmatprep.subr.mxu0 0.0
    %534 = vmatpush2.xpose.msra.mxu0 0.0
    %535 = vmatprep.subr.mxu0 0.0
    %536 = vmatpush2.xpose.msra.mxu0 0.0
    %537 = vmatprep.subr.mxu0 0.0
    %538 = vmatpush2.xpose.msra.mxu0 0.0
    %539 = vmatprep.subr.mxu0 0.0
    %540 = vmatpush2.xpose.msra.mxu0 0.0
    %541 = vmatprep.subr.mxu0 0.0
    %542 = vmatpush2.xpose.msra.mxu0 0.0
    %543 = vmatprep.subr.mxu0 0.0
    %544 = vmatpush2.xpose.msra.mxu0 0.0
    %545 = vmatprep.subr.mxu0 0.0
    %546 = vmatpush2.xpose.msra.mxu0 0.0
    %547 = vmatprep.subr.mxu0 0.0
    %548 = vmatpush2.xpose.msra.mxu0 0.0
    %549 = vmatprep.subr.mxu0 0.0
    %550 = vmatpush2.xpose.msra.mxu0 0.0
    %551 = vmatprep.subr.mxu0 0.0
    %552 = vmatpush2.xpose.msra.mxu0 0.0
    %553 = vmatprep.subr.mxu0 0.0
    %554 = vmatpush2.xpose.msra.mxu0 0.0
    %555 = vmatprep.subr.mxu0 0.0
    %556 = vmatpush2.xpose.msra.mxu0 0.0
    %557 = vmatprep.subr.mxu0 0.0
    %558 = vmatpush2.xpose.msra.mxu0 0.0
    %559 = vmatprep.subr.mxu0 0.0
    %560 = vmatpush2.xpose.msra.mxu0 0.0
    %561 = vmatprep.subr.mxu0 0.0
    %562 = vmatpush2.xpose.msra.mxu0 0.0
    %563 = vmatprep.mubr.f32.mxu0 0.0
    %564 = vmatmul.mubr.f32.gmra.mxu0 %v496
    %v565 = vpop.f32.mrf.mxu0
    %v566 = vadd.f32 %v498, %v565
    %v567 = vpop.f32.mrf.mxu0
    %568 = vdwg.mxu0
    %569 = vst [vmem:[#allocation3] sm:$0x1] %v566
    // Predicated region
    $region30: #{tpu_custom_call.1} parent=1 // pred_check
      _
    $region31: #{tpu_custom_call.1} parent=1 // pred_check_branch
      %571 = sbr.rel (0) target = $region33
    $region32: #{tpu_custom_call.1} parent=1 // pred_region
      %s573 = ssub.s32 16, 16
      %574 = vsyncadd [#allocation4], %s573
      %s576 = sshll.u32 [#allocation3], 4
      %s577 = int_to_ptr.vmem [resolvable:$true] %s576
      %579 = dma.vmem_to_hbm [thread:$0]  %s577, 16, %s7, [#allocation4]
    $region33: #{tpu_custom_call.1} parent=1 // pred_fallthru
      _
    // Predicated region
    $region34: #{tpu_custom_call.1} parent=1 // pred_check
      _
    $region35: #{tpu_custom_call.1} parent=1 // pred_check_branch
      %581 = sbr.rel (0) target = $region37
    $region36: #{tpu_custom_call.1} parent=1 // pred_region
      %582 = dma.done [#allocation4], 16
    $region37: #{tpu_custom_call.1} parent=1 // pred_fallthru
      _
    %583 = vsyncpa [#allocation4], 1

</llo_original>
